<compile_context>
chip_gen: v6e
topology: v6e:2x2x1
jax: 0.10.0
libtpu: 0.0.40
codegen_flags: <defaults>
</compile_context>

<pallas_src>
import functools

import jax
import jax.numpy as jnp
from jax.experimental import pallas as pl
from jax.experimental.pallas import tpu as pltpu


def _soft_target_kernel(s_ref, t_ref, o_ref, *, inv_T: float, tile_b: int, batch: int):
    """One batch tile: partial sum over rows of KL(p_t || p_s) for that tile."""
    i = pl.program_id(0)

    # Stream in the caller's dtype (e.g. bf16), compute in f32.
    # Multiply by 1/T instead of dividing (keeps the EUP free for the exps).
    s = s_ref[...].astype(jnp.float32) * inv_T
    t = t_ref[...].astype(jnp.float32) * inv_T

    # Student log-sum-exp over the class (lane) axis.
    s_max = jnp.max(s, axis=1, keepdims=True)
    s_lse = s_max + jnp.log(jnp.sum(jnp.exp(s - s_max), axis=1, keepdims=True))

    # Teacher shifted exponentials and log-sum-exp.
    t_max = jnp.max(t, axis=1, keepdims=True)
    t_exp = jnp.exp(t - t_max)
    t_sum = jnp.sum(t_exp, axis=1, keepdims=True)
    t_lse = t_max + jnp.log(t_sum)

    # KL row sum with the sum(p_t)=1 restructure:
    #   row_kl = sum_c p_t * (t_c - s_c) + LSE_s - LSE_t
    #          = [sum_c exp(t_c - t_max) * (t_c - s_c)] / t_sum + (LSE_s - LSE_t)
    cross = jnp.sum(t_exp * (t - s), axis=1, keepdims=True)
    row_kl = cross / t_sum + (s_lse - t_lse)          # exact per-row division

    # Mask rows past the true batch.  Only emitted when the grid is ragged
    # (static condition), and kept as a true select so padded-row NaN/Inf never
    # reach the scalar sum.
    if batch % tile_b != 0:
        row_ids = i * tile_b + jax.lax.broadcasted_iota(jnp.int32, (tile_b, 1), 0)
        row_kl = jnp.where(row_ids < batch, row_kl, 0.0)

    partial = jnp.sum(row_kl)

    # Lane-dense (8, 128) per-tile output block: partial sum at [0, 0], zeros
    # elsewhere, so the wrapper can simply jnp.sum() the whole slab.
    r = jax.lax.broadcasted_iota(jnp.int32, (8, 128), 0)
    c = jax.lax.broadcasted_iota(jnp.int32, (8, 128), 1)
    o_ref[...] = jnp.where((r == 0) & (c == 0), partial, 0.0).astype(jnp.float32)


def _vmem_capacity_bytes() -> int:
    """Physical VMEM per core; conservative fallback if the query is unavailable."""
    try:
        info = pltpu.get_tpu_info()
        cap = getattr(info, "vmem_capacity_bytes", None)
        if cap:
            return int(cap)
    except Exception:
        pass
    return 64 * 1024 * 1024  # v7x-sized fallback; safe on every generation


def _pick_tile_b(B: int, C: int, itemsize: int, budget_bytes: int) -> int:
    # Per resident batch row in VMEM:
    #   2 inputs x 2 pipeline buffers of the streamed dtype
    # + ~6 full-tile f32 temporaries inside the kernel body.
    bytes_per_row = C * (4 * itemsize + 6 * 4)
    tile = budget_bytes // max(bytes_per_row, 1)
    tile = (tile // 8) * 8
    return max(8, tile)          # no artificial cap: VMEM budget is the bound


def soft_target_loss(out_s: jax.Array, out_t: jax.Array, T: float, *, tile_b=None) -> jax.Array:
    assert out_s.shape == out_t.shape and out_s.ndim == 2
    assert float(T) != 0.0
    B, C = out_s.shape
    itemsize = jnp.dtype(out_s.dtype).itemsize

    vmem_cap = _vmem_capacity_bytes()
    budget = vmem_cap // 3                       # working-set budget for one tile
    vmem_limit = max(32 * 1024 * 1024, int(0.75 * vmem_cap))

    if tile_b is None:
        tile_b = _pick_tile_b(B, C, itemsize, budget)
        if B >= 16:
            # At least 2 tiles so the 'parallel' grid axis can shard over both
            # v7x TensorCores (single tile leaves one TC idle).
            half_b = (((B + 1) // 2) + 7) // 8 * 8
            tile_b = min(tile_b, half_b)

    if tile_b >= B:
        tile_b = B                               # single full-batch tile (full-dim block)
    else:
        tile_b = max(8, (tile_b // 8) * 8)       # keep the sublane axis 8-aligned
        # Prefer an even tile count so no TC idles on a trailing odd step (v7x).
        nt = -(-B // tile_b)
        if nt > 1 and nt % 2 == 1:
            cand = max(8, ((-(-B // (nt + 1))) + 7) // 8 * 8)
            if cand < B and (-(-B // cand)) % 2 == 0:
                tile_b = cand

    # Guard: one tile of both inputs (double-buffered) + f32 temporaries must fit
    # the VMEM limit.  Vocab-sized C needs class-axis chunking.
    # TODO(synk): add class-axis (C) chunking with an online logsumexp for very large C.
    working_set = tile_b * C * (4 * itemsize + 6 * 4)
    assert working_set <= vmem_limit, (
        f"num_classes={C} too large for a single class-axis block "
        f"(working set {working_set} B > VMEM limit {vmem_limit} B)")

    num_tiles = pl.cdiv(B, tile_b)
    kernel = functools.partial(
        _soft_target_kernel, inv_T=1.0 / float(T), tile_b=tile_b, batch=B)

    partials = pl.pallas_call(
        kernel,
        out_shape=jax.ShapeDtypeStruct((num_tiles * 8, 128), jnp.float32),
        grid=(num_tiles,),
        in_specs=[
            pl.BlockSpec((tile_b, C), lambda i: (i, 0)),
            pl.BlockSpec((tile_b, C), lambda i: (i, 0)),
        ],
        out_specs=pl.BlockSpec((8, 128), lambda i: (i, 0)),
        compiler_params=pltpu.CompilerParams(
            dimension_semantics=("parallel",),   # shard batch tiles over TCs (v7x)
            vmem_limit_bytes=vmem_limit,         # generation-aware scoped VMEM
        ),
    )(out_s, out_t)

    # Tiny final reduction + batchmean + T^2 scaling in plain JAX.
    return jnp.sum(partials) * (float(T) * float(T)) / B


def _reference(out_s, out_t, T):
    # Pure-JAX reference (matches F.kl_div(..., reduction='batchmean') * T^2).
    log_p_s = jax.nn.log_softmax(out_s.astype(jnp.float32) / T, axis=1)
    p_t = jax.nn.softmax(out_t.astype(jnp.float32) / T, axis=1)
    log_p_t = jax.nn.log_softmax(out_t.astype(jnp.float32) / T, axis=1)
    kl = jnp.sum(p_t * (log_p_t - log_p_s)) / out_s.shape[0]
    return kl * T * T


if __name__ == "__main__":
    T = 4.0
    key = jax.random.PRNGKey(0)
    k1, k2, k3, k4 = jax.random.split(key, 4)

    # Small (batch, num_classes) logits; B=16 exercises the >=2-tile v7x path.
    B, C = 16, 128
    out_s = jax.random.normal(k1, (B, C), dtype=jnp.float32)
    out_t = jax.random.normal(k2, (B, C), dtype=jnp.float32)

    loss = soft_target_loss(out_s, out_t, T)
    jax.block_until_ready(loss)
    ref = _reference(out_s, out_t, T)
    assert jnp.allclose(loss, ref, rtol=1e-5, atol=1e-5), (loss, ref)

    # Exercise the batch-tiled grid, last-tile row masking and bf16 streaming.
    B2, C2 = 20, 96
    s_bf16 = jax.random.normal(k3, (B2, C2), dtype=jnp.float32).astype(jnp.bfloat16)
    t_bf16 = jax.random.normal(k4, (B2, C2), dtype=jnp.float32).astype(jnp.bfloat16)
    loss2 = soft_target_loss(s_bf16, t_bf16, T, tile_b=8)   # 3 tiles, 4 masked rows
    jax.block_until_ready(loss2)
    ref2 = _reference(s_bf16.astype(jnp.float32), t_bf16.astype(jnp.float32), T)
    assert jnp.allclose(loss2, ref2, rtol=1e-4, atol=1e-4), (loss2, ref2)

    # Auto tile path on a non-multiple-of-16 batch (ragged last tile, auto tiling).
    B3, C3 = 24, 256
    s3 = jax.random.normal(k1, (B3, C3), dtype=jnp.float32)
    t3 = jax.random.normal(k2, (B3, C3), dtype=jnp.float32)
    loss3 = soft_target_loss(s3, t3, 2.0)
    jax.block_until_ready(loss3)
    ref3 = _reference(s3, t3, 2.0)
    assert jnp.allclose(loss3, ref3, rtol=1e-5, atol=1e-5), (loss3, ref3)

    print("KERNEL_OK")
</pallas_src>

<mosaic_0001>
module attributes {stable_mosaic.version = 11 : i64} {
  func.func @_soft_target_kernel(%arg0: i32, %arg1: memref<8x128xf32, #tpu.memory_space<vmem>>, %arg2: memref<8x128xf32, #tpu.memory_space<vmem>>, %arg3: memref<8x128xf32, #tpu.memory_space<vmem>>) attributes {dimension_semantics = [#tpu.dimension_semantics<parallel>], iteration_bounds = array<i64: 2>, scalar_prefetch = 0 : i64, scratch_operands = 0 : i64, tpu.core_type = #tpu.core_type<tc>, window_params = [{transform_indices = @transform_0, window_bounds = array<i64: 8, 128>}, {transform_indices = @transform_1, window_bounds = array<i64: 8, 128>}, {transform_indices = @transform_2, window_bounds = array<i64: 8, 128>}]} {
    %c0 = arith.constant 0 : index
    %c0_0 = arith.constant 0 : index
    %0 = vector.load %arg1[%c0, %c0_0] : memref<8x128xf32, #tpu.memory_space<vmem>>, vector<8x128xf32>
    %cst = arith.constant 2.500000e-01 : f32
    %1 = vector.broadcast %cst : f32 to vector<8x128xf32>
    %2 = arith.mulf %0, %1 : vector<8x128xf32>
    %c0_1 = arith.constant 0 : index
    %c0_2 = arith.constant 0 : index
    %3 = vector.load %arg2[%c0_1, %c0_2] : memref<8x128xf32, #tpu.memory_space<vmem>>, vector<8x128xf32>
    %cst_3 = arith.constant 2.500000e-01 : f32
    %4 = vector.broadcast %cst_3 : f32 to vector<8x128xf32>
    %5 = arith.mulf %3, %4 : vector<8x128xf32>
    %cst_4 = arith.constant dense<0xFF800000> : vector<8xf32>
    %6 = vector.multi_reduction <maximumf>, %2, %cst_4 [1] : vector<8x128xf32> to vector<8xf32>
    %7 = vector.shape_cast %6 : vector<8xf32> to vector<8x1xf32>
    %8 = vector.broadcast %7 : vector<8x1xf32> to vector<8x128xf32>
    %9 = arith.subf %2, %8 : vector<8x128xf32>
    %10 = math.exp %9 : vector<8x128xf32>
    %cst_5 = arith.constant dense<0.000000e+00> : vector<8xf32>
    %11 = vector.multi_reduction <add>, %10, %cst_5 [1] : vector<8x128xf32> to vector<8xf32>
    %12 = vector.shape_cast %11 : vector<8xf32> to vector<8x1xf32>
    %13 = math.log %12 : vector<8x1xf32>
    %14 = arith.addf %7, %13 : vector<8x1xf32>
    %cst_6 = arith.constant dense<0xFF800000> : vector<8xf32>
    %15 = vector.multi_reduction <maximumf>, %5, %cst_6 [1] : vector<8x128xf32> to vector<8xf32>
    %16 = vector.shape_cast %15 : vector<8xf32> to vector<8x1xf32>
    %17 = vector.broadcast %16 : vector<8x1xf32> to vector<8x128xf32>
    %18 = arith.subf %5, %17 : vector<8x128xf32>
    %19 = math.exp %18 : vector<8x128xf32>
    %cst_7 = arith.constant dense<0.000000e+00> : vector<8xf32>
    %20 = vector.multi_reduction <add>, %19, %cst_7 [1] : vector<8x128xf32> to vector<8xf32>
    %21 = vector.shape_cast %20 : vector<8xf32> to vector<8x1xf32>
    %22 = math.log %21 : vector<8x1xf32>
    %23 = arith.addf %16, %22 : vector<8x1xf32>
    %24 = arith.subf %5, %2 : vector<8x128xf32>
    %25 = arith.mulf %19, %24 : vector<8x128xf32>
    %cst_8 = arith.constant dense<0.000000e+00> : vector<8xf32>
    %26 = vector.multi_reduction <add>, %25, %cst_8 [1] : vector<8x128xf32> to vector<8xf32>
    %27 = vector.shape_cast %26 : vector<8xf32> to vector<8x1xf32>
    %28 = arith.divf %27, %21 : vector<8x1xf32>
    %29 = arith.subf %14, %23 : vector<8x1xf32>
    %30 = arith.addf %28, %29 : vector<8x1xf32>
    %31 = vector.shape_cast %30 : vector<8x1xf32> to vector<1x8x1xf32>
    %cst_9 = arith.constant dense<0.000000e+00> : vector<1xf32>
    %32 = vector.multi_reduction <add>, %31, %cst_9 [1, 2] : vector<1x8x1xf32> to vector<1xf32>
    %33 = vector.shape_cast %32 : vector<1xf32> to vector<1x1x1xf32>
    %34 = vector.extract %33[0, 0, 0] : f32 from vector<1x1x1xf32>
    %35 = tpu.iota {dimensions = array<i32: 0>} : vector<8x128xi32>
    %36 = tpu.iota {dimensions = array<i32: 1>} : vector<8x128xi32>
    %c0_i32 = arith.constant 0 : i32
    %37 = vector.broadcast %c0_i32 : i32 to vector<8x128xi32>
    %38 = arith.cmpi eq, %35, %37 : vector<8x128xi32>
    %c0_i32_10 = arith.constant 0 : i32
    %39 = vector.broadcast %c0_i32_10 : i32 to vector<8x128xi32>
    %40 = arith.cmpi eq, %36, %39 : vector<8x128xi32>
    %41 = arith.andi %38, %40 : vector<8x128xi1>
    %cst_11 = arith.constant 0.000000e+00 : f32
    %42 = vector.broadcast %34 : f32 to vector<8x128xf32>
    %43 = vector.broadcast %cst_11 : f32 to vector<8x128xf32>
    %44 = arith.select %41, %42, %43 : vector<8x128xi1>, vector<8x128xf32>
    %c0_12 = arith.constant 0 : index
    %c0_13 = arith.constant 0 : index
    %45 = vector.load %arg3[%c0_12, %c0_13] : memref<8x128xf32, #tpu.memory_space<vmem>>, vector<8x128xf32>
    tpu.vector_store %arg3[%c0_12, %c0_13], %44 {strides = array<i32>} : memref<8x128xf32, #tpu.memory_space<vmem>>, vector<8x128xf32>,
    return
  }
  func.func @transform_0(%arg0: i32) -> (i32, i32) {
    %c0_i32 = arith.constant 0 : i32
    %c0_i32_0 = arith.constant 0 : i32
    return %arg0, %c0_i32 : i32, i32
  }
  func.func @transform_1(%arg0: i32) -> (i32, i32) {
    %c0_i32 = arith.constant 0 : i32
    %c0_i32_0 = arith.constant 0 : i32
    return %arg0, %c0_i32 : i32, i32
  }
  func.func @transform_2(%arg0: i32) -> (i32, i32) {
    %c0_i32 = arith.constant 0 : i32
    %c0_i32_0 = arith.constant 0 : i32
    return %arg0, %c0_i32 : i32, i32
  }
}

</mosaic_0001>

<llo_original>
// kernel: tpu_custom_call.1
$region0: #{tpu_custom_call.1}
  #allocation0 [shape = 'u32[]', space=smem, size = 0x4, offset = 0x4, fixed_abs, tag = 'smem constant byte address 0x4 - core index']
  #allocation1 [shape = 'u32[144,128]{1,0:T(1,128)}', space=vmem, size = 0x12000, scoped, tag = 'internal scratch']
  %s0 = inlined_call_operand.hbm [shape: f32[16,128], index: 0, kind: input, shape index: {}]
  %s1 = inlined_call_operand.hbm [shape: f32[16,128], index: 1, kind: input, shape index: {}]
  %s2 = inlined_call_operand.hbm [shape: f32[16,128], index: 2, kind: output, shape index: {}]
  %s3 = sld [smem:[#allocation0]]
  $region49: #{tpu_custom_call.1} parent=0
    _
  %s5 = ssub.s32 1, %s3
  %s6 = scalar_select 0, %s5, %s3
  $region1: #{tpu_custom_call.1} parent=0
    #allocation2 [shape = 'u8[8192]{0}', space=vmem, size = 0x2000, scoped, tag = 'input window, operand 0']
    #allocation3 [shape = 's32[2]{0}', space=sflag, size = 0x8, scoped, tag = 'scoped memory for tpu_custom_call.1']
    #allocation4 [shape = 's32[2]{0}', space=sflag, size = 0x8, scoped, tag = 'scoped memory for tpu_custom_call.1']
    #allocation5 [shape = 'u8[8192]{0}', space=vmem, size = 0x2000, scoped, tag = 'input window, operand 1']
    #allocation6 [shape = 's32[2]{0}', space=sflag, size = 0x8, scoped, tag = 'scoped memory for tpu_custom_call.1']
    #allocation7 [shape = 'u8[8192]{0}', space=vmem, size = 0x2000, scoped, tag = 'output window, operand 0']
    %7 = vsyncpa [#allocation3], 0
    %s8 = scalar_lea.sflag [#allocation3], 1
    %9 = vsyncpa %s8, 0
    %10 = vsyncpa [#allocation6], 0
    %s11 = scalar_lea.sflag [#allocation6], 1
    %12 = vsyncpa %s11, 0
    %13 = vsyncpa [#allocation4], 0
    %s14 = scalar_lea.sflag [#allocation4], 1
    %15 = vsyncpa %s14, 0
    loop: start=0, step=1, limit=4
    $region2: #{tpu_custom_call.1} parent=1 // loop_pre_header
      _
    $region3: #{tpu_custom_call.1} parent=1 // loop_header
      %s17 = sphi 0, %s21
      %p18 = scmp.ge.s32.totalorder %s17, 4
      %s27 = sphi 0, %s29
      %s30 = sphi 0, %s27
      %s31 = sphi 0, %s30
      %s47 = sphi 0, %s31
      %s53 = sphi 0, %s55
      %s56 = sphi 0, %s53
      %s57 = sphi 0, %s56
      %s73 = sphi 0, %s57
      %s79 = sphi 0, %s81
      %s82 = sphi 0, %s79
      %s83 = sphi 0, %s82
      %s99 = sphi 0, %s83
    $region4: #{tpu_custom_call.1} parent=1 // loop_header_branch
      %20 = sbr.rel (%p18) target = $region8
    $region5: #{tpu_custom_call.1} parent=1 // loop_body
      %s22 = ssub.s32 %s17, 1
      %s23 = ssub.s32 %s17, 2
      %s24 = sadd.s32 %s17, 1
      %s25 = ssub.s32 %s17, %s24
      %p26 = scmp.eq.s32.totalorder %s25, 0
      %s28 = sadd.s32 %s27, 1
      %s29 = scalar_select %p26, %s27, %s28
      %p32 = pneg %p26
      %p33 = scmp.eq.s32.totalorder %s17, 1
      %p34 = por %p32, %p33
      %p35 = scmp.ne.s32.totalorder %s27, %s30
      %p36 = scmp.eq.s32.totalorder %s17, 0
      %p37 = por %p35, %p36
      %p38 = scmp.ne.s32.totalorder %s27, %s30
      %p39 = scmp.eq.s32.totalorder %s22, 1
      %p40 = por %p38, %p39
      %p41 = scmp.ne.s32.totalorder %s30, %s31
      %p42 = scmp.eq.s32.totalorder %s22, 0
      %p43 = por %p41, %p42
      %p44 = scmp.ne.s32.totalorder %s30, %s31
      %p45 = scmp.eq.s32.totalorder %s23, 1
      %p46 = por %p44, %p45
      %p48 = scmp.ne.s32.totalorder %s31, %s47
      %p49 = scmp.eq.s32.totalorder %s23, 0
      %p50 = por %p48, %p49
      %s51 = ssub.s32 %s17, %s24
      %p52 = scmp.eq.s32.totalorder %s51, 0
      %s54 = sadd.s32 %s53, 1
      %s55 = scalar_select %p52, %s53, %s54
      %p58 = pneg %p52
      %p59 = scmp.eq.s32.totalorder %s17, 1
      %p60 = por %p58, %p59
      %p61 = scmp.ne.s32.totalorder %s53, %s56
      %p62 = scmp.eq.s32.totalorder %s17, 0
      %p63 = por %p61, %p62
      %p64 = scmp.ne.s32.totalorder %s53, %s56
      %p65 = scmp.eq.s32.totalorder %s22, 1
      %p66 = por %p64, %p65
      %p67 = scmp.ne.s32.totalorder %s56, %s57
      %p68 = scmp.eq.s32.totalorder %s22, 0
      %p69 = por %p67, %p68
      %p70 = scmp.ne.s32.totalorder %s56, %s57
      %p71 = scmp.eq.s32.totalorder %s23, 1
      %p72 = por %p70, %p71
      %p74 = scmp.ne.s32.totalorder %s57, %s73
      %p75 = scmp.eq.s32.totalorder %s23, 0
      %p76 = por %p74, %p75
      %s77 = ssub.s32 %s17, %s24
      %p78 = scmp.eq.s32.totalorder %s77, 0
      %s80 = sadd.s32 %s79, 1
      %s81 = scalar_select %p78, %s79, %s80
      %p84 = pneg %p78
      %p85 = scmp.eq.s32.totalorder %s17, 1
      %p86 = por %p84, %p85
      %p87 = scmp.ne.s32.totalorder %s79, %s82
      %p88 = scmp.eq.s32.totalorder %s17, 0
      %p89 = por %p87, %p88
      %p90 = scmp.ne.s32.totalorder %s79, %s82
      %p91 = scmp.eq.s32.totalorder %s22, 1
      %p92 = por %p90, %p91
      %p93 = scmp.ne.s32.totalorder %s82, %s83
      %p94 = scmp.eq.s32.totalorder %s22, 0
      %p95 = por %p93, %p94
      %p96 = scmp.ne.s32.totalorder %s82, %s83
      %p97 = scmp.eq.s32.totalorder %s23, 1
      %p98 = por %p96, %p97
      %p100 = scmp.ne.s32.totalorder %s83, %s99
      %p101 = scmp.eq.s32.totalorder %s23, 0
      %p102 = por %p100, %p101
      %p103 = scmp.le.s32.totalorder 1, %s17
      %p104 = scmp.lt.s32.totalorder %s17, 3
      %p105 = pnand %p103, %p104
      %p106 = pneg %p105
      // Predicated region
      $region9: #{tpu_custom_call.1} parent=5 // pred_check
        _
      $region10: #{tpu_custom_call.1} parent=5 // pred_check_branch
        %108 = sbr.rel (%p105) target = $region12
      $region11: #{tpu_custom_call.1} parent=5 // pred_region
        %s109 = ssub.s32 %s17, 1
      $region12: #{tpu_custom_call.1} parent=5 // pred_fallthru
        _
      %p110 = scmp.lt.s32.totalorder %s17, 2
      // Predicated region
      $region13: #{tpu_custom_call.1} parent=5 // pred_check
        %p111 = pneg %p110
      $region14: #{tpu_custom_call.1} parent=5 // pred_check_branch
        %113 = sbr.rel (%p111) target = $region16
      $region15: #{tpu_custom_call.1} parent=5 // pred_region
        // Predicated region
        $region17: #{tpu_custom_call.1} parent=15 // pred_check
          %p114 = pneg %p37
        $region18: #{tpu_custom_call.1} parent=15 // pred_check_branch
          %116 = sbr.rel (%p114) target = $region20
        $region19: #{tpu_custom_call.1} parent=15 // pred_region
          %s117 = sand.u32 %s27, 1
          %s118 = scalar_lea.sflag [#allocation3], %s117
          %s119 = sand.u32 %s27, 1
          %s120 = smul.addr %s119, 8
          %s121 = scalar_lea.vmem [#allocation2], %s120
          %s123 = ssub.s32 128, 128
          %124 = vsyncadd %s118, %s123
          %s125 = smul.addr %s17, 128
          %s126 = scalar_lea.hbm %s0, %s125
          %s128 = sshll.u32 %s121, 4
          %s129 = int_to_ptr.vmem [resolvable:$true] %s128
          %131 = dma.hbm_to_vmem [thread:$0]  %s126, 128, %s129, %s118
        $region20: #{tpu_custom_call.1} parent=15 // pred_fallthru
          _
        // Predicated region
        $region21: #{tpu_custom_call.1} parent=15 // pred_check
          %p132 = pneg %p63
        $region22: #{tpu_custom_call.1} parent=15 // pred_check_branch
          %134 = sbr.rel (%p132) target = $region24
        $region23: #{tpu_custom_call.1} parent=15 // pred_region
          %s135 = sand.u32 %s53, 1
          %s136 = scalar_lea.sflag [#allocation6], %s135
          %s137 = sand.u32 %s53, 1
          %s138 = smul.addr %s137, 8
          %s139 = scalar_lea.vmem [#allocation5], %s138
          %s141 = ssub.s32 128, 128
          %142 = vsyncadd %s136, %s141
          %s143 = smul.addr %s17, 128
          %s144 = scalar_lea.hbm %s1, %s143
          %s146 = sshll.u32 %s139, 4
          %s147 = int_to_ptr.vmem [resolvable:$true] %s146
          %149 = dma.hbm_to_vmem [thread:$0]  %s144, 128, %s147, %s136
        $region24: #{tpu_custom_call.1} parent=15 // pred_fallthru
          _
      $region16: #{tpu_custom_call.1} parent=5 // pred_fallthru
        _
      %p150 = scmp.le.s32.totalorder 1, %s17
      %p151 = scmp.lt.s32.totalorder %s17, 3
      %p152 = pnand %p150, %p151
      %p153 = pneg %p152
      // Predicated region
      $region25: #{tpu_custom_call.1} parent=5 // pred_check
        _
      $region26: #{tpu_custom_call.1} parent=5 // pred_check_branch
        %155 = sbr.rel (%p152) target = $region28
      $region27: #{tpu_custom_call.1} parent=5 // pred_region
        %s156 = ssub.s32 %s17, 1
        %s157 = sand.u32 %s30, 1
        %s158 = scalar_lea.sflag [#allocation3], %s157
        %s159 = sand.u32 %s30, 1
        %s160 = smul.addr %s159, 8
        %s161 = scalar_lea.vmem [#allocation2], %s160
        // Predicated region
        $region29: #{tpu_custom_call.1} parent=27 // pred_check
          %p162 = pneg %p43
        $region30: #{tpu_custom_call.1} parent=27 // pred_check_branch
          %164 = sbr.rel (%p162) target = $region32
        $region31: #{tpu_custom_call.1} parent=27 // pred_region
          %165 = dma.done %s158, 128
        $region32: #{tpu_custom_call.1} parent=27 // pred_fallthru
          _
        %s166 = sand.u32 %s56, 1
        %s167 = scalar_lea.sflag [#allocation6], %s166
        %s168 = sand.u32 %s56, 1
        %s169 = smul.addr %s168, 8
        %s170 = scalar_lea.vmem [#allocation5], %s169
        // Predicated region
        $region33: #{tpu_custom_call.1} parent=27 // pred_check
          %p171 = pneg %p69
        $region34: #{tpu_custom_call.1} parent=27 // pred_check_branch
          %173 = sbr.rel (%p171) target = $region36
        $region35: #{tpu_custom_call.1} parent=27 // pred_region
          %174 = dma.done %s167, 128
        $region36: #{tpu_custom_call.1} parent=27 // pred_fallthru
          _
        %s175 = sand.u32 %s30, 1
        %s176 = scalar_lea.sflag [#allocation3], %s175
        %s177 = sand.u32 %s30, 1
        %s178 = smul.addr %s177, 8
        %s179 = scalar_lea.vmem [#allocation2], %s178
        %p180 = pneg %p43
        %p181 = pneg %p40
        %s182 = sand.u32 %s56, 1
        %s183 = scalar_lea.sflag [#allocation6], %s182
        %s184 = sand.u32 %s56, 1
        %s185 = smul.addr %s184, 8
        %s186 = scalar_lea.vmem [#allocation5], %s185
        %p187 = pneg %p69
        %p188 = pneg %p66
        %p189 = pneg %p95
        %p190 = pneg %p92
        %s191 = sand.u32 %s82, 1
        %s192 = scalar_lea.sflag [#allocation4], %s191
        %s193 = sand.u32 %s82, 1
        %s194 = smul.addr %s193, 8
        %s195 = scalar_lea.vmem [#allocation7], %s194
        %v196 = vld [vmem:[%s161] sm:$0xff]
        %v197 = vmul.f32 %v196, 0.25
        %v198 = vld [vmem:[%s170] sm:$0xff]
        %v199 = vmul.f32 %v198, 0.25
        %200 = vmax.xlane.f32.xlu0 %v197
        %v201 = vpop.xlane.xlu0 %200
        %v202 = vsub.f32 %v197, %v201
        %v203 = vmul.f32 %v202, 1.442695
        %v204 = vpow.pop %v203
        %205 = vadd.xlane.f32.xlu0 %v204
        %v206 = vpop.xlane.xlu0 %205
        %v207 = vlog2.pop %v206
        %v208 = vmul.f32 %v207, 0.6931472
        %v209 = vadd.f32 %v201, %v208
        %210 = vmax.xlane.f32.xlu0 %v199
        %v211 = vpop.xlane.xlu0 %210
        %v212 = vsub.f32 %v199, %v211
        %v213 = vmul.f32 %v212, 1.442695
        %v214 = vpow.pop %v213
        %215 = vadd.xlane.f32.xlu0 %v214
        %v216 = vpop.xlane.xlu0 %215
        %v217 = vlog2.pop %v216
        %v218 = vmul.f32 %v217, 0.6931472
        %v219 = vadd.f32 %v211, %v218
        %v220 = vsub.f32 %v199, %v197
        %v221 = vmul.f32 %v214, %v220
        %222 = vadd.xlane.f32.xlu0 %v221
        %v223 = vpop.xlane.xlu0 %222
        %v224 = vrcp.pop %v216
        %v225 = vmul.f32 %v223, %v224
        %v226 = vsub.f32 %v209, %v219
        %v227 = vadd.f32 %v225, %v226
        %vm228 = vcmask 7168
        %v229 = vsel %vm228, %v227, 0.0
        %230 = vadd.xlane.f32.xlu0 %v229
        %v231 = vpop.xlane.xlu0 %230
        %v232 = vrot.slane %v231, 4
        %v233 = vadd.f32 %v231, %v232
        %v234 = vrot.slane %v233, 2
        %v235 = vadd.f32 %v233, %v234
        %v236 = vrot.slane %v235, 1
        %v237 = vadd.f32 %v235, %v236
        %s238 = vtos %v237
        %v239 = vlaneseq
        %v240 = vshrl.u32 %v239, 7
        %v241 = vlaneseq
        %v242 = vand.u32 %v241, 127
        %vm243 = vcmp.eq.s32.totalorder %v240, 0
        %vm244 = vcmp.eq.s32.totalorder %v242, 0
        %vm245 = vmand %vm243, %vm244
        %v246 = vstv %s238
        %v247 = vsel %vm245, %v246, 0.0
        %248 = vst [vmem:[%s195] sm:$0xff] %v247
        %s249 = sand.u32 %s82, 1
        %s250 = scalar_lea.sflag [#allocation4], %s249
        %s251 = sand.u32 %s82, 1
        %s252 = smul.addr %s251, 8
        %s253 = scalar_lea.vmem [#allocation7], %s252
        // Predicated region
        $region37: #{tpu_custom_call.1} parent=27 // pred_check
          %p254 = pneg %p92
        $region38: #{tpu_custom_call.1} parent=27 // pred_check_branch
          %256 = sbr.rel (%p254) target = $region40
        $region39: #{tpu_custom_call.1} parent=27 // pred_region
          %s258 = ssub.s32 128, 128
          %259 = vsyncadd %s250, %s258
          %s260 = smul.addr %s22, 128
          %s261 = scalar_lea.hbm %s2, %s260
          %s263 = sshll.u32 %s253, 4
          %s264 = int_to_ptr.vmem [resolvable:$true] %s263
          %266 = dma.vmem_to_hbm [thread:$0]  %s264, 128, %s261, %s250
        $region40: #{tpu_custom_call.1} parent=27 // pred_fallthru
          _
      $region28: #{tpu_custom_call.1} parent=5 // pred_fallthru
        _
      %p267 = scmp.le.s32.totalorder 2, %s17
      // Predicated region
      $region41: #{tpu_custom_call.1} parent=5 // pred_check
        %p268 = pneg %p267
      $region42: #{tpu_custom_call.1} parent=5 // pred_check_branch
        %270 = sbr.rel (%p268) target = $region44
      $region43: #{tpu_custom_call.1} parent=5 // pred_region
        %s271 = ssub.s32 %s17, 2
        // Predicated region
        $region45: #{tpu_custom_call.1} parent=43 // pred_check
          %p272 = pneg %p98
        $region46: #{tpu_custom_call.1} parent=43 // pred_check_branch
          %274 = sbr.rel (%p272) target = $region48
        $region47: #{tpu_custom_call.1} parent=43 // pred_region
          %s275 = sand.u32 %s83, 1
          %s276 = scalar_lea.sflag [#allocation4], %s275
          %s277 = sand.u32 %s83, 1
          %s278 = smul.addr %s277, 8
          %s279 = scalar_lea.vmem [#allocation7], %s278
          %280 = dma.done %s276, 128
        $region48: #{tpu_custom_call.1} parent=43 // pred_fallthru
          _
      $region44: #{tpu_custom_call.1} parent=5 // pred_fallthru
        _
    $region6: #{tpu_custom_call.1} parent=1 // loop_footer
      %s21 = sadd.s32 1, %s17
    $region7: #{tpu_custom_call.1} parent=1 // loop_footer_branch
      %16 = sbr.rel target = $region3
    $region8: #{tpu_custom_call.1} parent=1 // loop_exit
      _
    %281 = vsyncpa [#allocation3], 1
    %s282 = scalar_lea.sflag [#allocation3], 1
    %283 = vsyncpa %s282, 1
    %284 = vsyncpa [#allocation6], 1
    %s285 = scalar_lea.sflag [#allocation6], 1
    %286 = vsyncpa %s285, 1
    %287 = vsyncpa [#allocation4], 1
    %s288 = scalar_lea.sflag [#allocation4], 1
    %289 = vsyncpa %s288, 1

</llo_original>
